<compile_context>
chip_gen: v5e
topology: v5e:2x2
jax: 0.10.0
libtpu: 0.0.40
codegen_flags: <defaults>
</compile_context>

<pallas_src>
import functools

import jax
import jax.numpy as jnp
from jax.experimental import pallas as pl
from jax.experimental.pallas import tpu as pltpu

INPUT_DIM = 9
HIDDEN = 25
OUTPUT_DIM = 1
LANE = 128


def _round_up(n, m):
    return ((n + m - 1) // m) * m


# --------------------------------------------------------------------------- #
# Kernel
# --------------------------------------------------------------------------- #
def _mlp_kernel(x_ref, w1_ref, b1_ref, w2_ref, b2_ref, o_ref):
    # Feature-major: x is [9, TILE_B], output is [1, TILE_B] (lane-dense).
    x = x_ref[...]                                                    # [9, TILE_B] f32
    h = jnp.dot(w1_ref[...], x, preferred_element_type=jnp.float32)  # [25, TILE_B]
    h = jax.nn.sigmoid(h + b1_ref[...])                               # + [25, 1] broadcast
    y = jnp.dot(w2_ref[...], h, preferred_element_type=jnp.float32)  # [1, TILE_B]
    y = y + b2_ref[0, 0]                                              # scalar bias from SMEM
    o_ref[...] = jax.nn.sigmoid(y).astype(o_ref.dtype)


# --------------------------------------------------------------------------- #
# Tile / VMEM budgeting
# --------------------------------------------------------------------------- #
def _tpu_vmem_capacity_bytes():
    try:
        return pltpu.get_tpu_info().vmem_capacity_bytes
    except Exception:
        return 64 << 20  # conservative (v7x-sized) fallback


def _max_tile_for_device(vmem_cap):
    # 128 MiB-VMEM parts (v5e/v6e) take 64K-lane tiles; v7x (64 MiB) takes 32K.
    return 65536 if vmem_cap >= (100 << 20) else 32768


def _pick_tile_b(b_lane, max_tile):
    """b_lane is a multiple of 128. Pick the largest tile <= max_tile that
    divides b_lane exactly, preferring >= 2 tiles so megacore can shard."""
    t = min(max_tile, b_lane)
    if b_lane > LANE:
        # Cap so there are at least 2 grid steps (v7x megacore sharding).
        t = min(t, _round_up(b_lane // 2, LANE))
    t = max(t, LANE)
    while b_lane % t != 0:       # shrink to an exact divisor (multiple of 128)
        t -= LANE
    return t


def _vmem_limit_bytes(tile_b, vmem_cap):
    # Per-tile f32 footprint: double-buffered x block (9 -> 16 sublanes),
    # hidden-activation scratch (25 -> 32 sublanes), double-buffered out
    # (1 -> 8 sublanes), plus weights / headroom.
    need = 4 * tile_b * (2 * 16 + 32 + 2 * 8) + (2 << 20)
    limit = max(32 << 20, 2 * need)
    return int(min(limit, vmem_cap - (16 << 20)))


# --------------------------------------------------------------------------- #
# Hot path: producer-supplied feature-major input (no wrapper relayout pass)
# --------------------------------------------------------------------------- #
def mlp_forward_feature_major(x_fm, w1, b1, w2, b2, *, tile_b=None):
    """x_fm: [9, B] feature-major, B a multiple of 128. Returns [1, B] f32.

    This is the zero-extra-HBM-pass path: the only traffic is the kernel's own
    streaming read of x_fm and write of the [1, B] output.
    """
    in_dim, b = x_fm.shape
    assert in_dim == INPUT_DIM
    assert b % LANE == 0, "feature-major fast path requires batch % 128 == 0"

    vmem_cap = _tpu_vmem_capacity_bytes()
    if tile_b is None:
        tile_b = _pick_tile_b(b, _max_tile_for_device(vmem_cap))
    assert tile_b % LANE == 0 and b % tile_b == 0
    num_tiles = b // tile_b

    if x_fm.dtype != jnp.float32:
        x_fm = x_fm.astype(jnp.float32)
    w1f = w1.astype(jnp.float32)                        # [25, 9]
    b1_col = b1.reshape(HIDDEN, 1).astype(jnp.float32)  # [25, 1]
    w2f = w2.astype(jnp.float32)                        # [1, 25]
    b2_s = b2.reshape(1, 1).astype(jnp.float32)         # [1, 1] -> SMEM

    cost = pl.CostEstimate(
        flops=2 * b * (INPUT_DIM * HIDDEN + HIDDEN * OUTPUT_DIM),
        transcendentals=(HIDDEN + OUTPUT_DIM) * b,
        bytes_accessed=b * 4 * (INPUT_DIM + OUTPUT_DIM)
        + 4 * (INPUT_DIM * HIDDEN + HIDDEN + HIDDEN * OUTPUT_DIM + OUTPUT_DIM),
    )

    return pl.pallas_call(
        _mlp_kernel,
        out_shape=jax.ShapeDtypeStruct((OUTPUT_DIM, b), jnp.float32),
        grid=(num_tiles,),
        in_specs=[
            pl.BlockSpec((INPUT_DIM, tile_b), lambda i: (0, i)),    # x^T, streamed
            pl.BlockSpec((HIDDEN, INPUT_DIM), lambda i: (0, 0)),    # W1, resident
            pl.BlockSpec((HIDDEN, 1), lambda i: (0, 0)),            # b1, resident
            pl.BlockSpec((OUTPUT_DIM, HIDDEN), lambda i: (0, 0)),   # W2, resident
            pl.BlockSpec(memory_space=pltpu.MemorySpace.SMEM),      # b2 scalar
        ],
        out_specs=pl.BlockSpec((OUTPUT_DIM, tile_b), lambda i: (0, i)),
        compiler_params=pltpu.CompilerParams(
            dimension_semantics=("parallel",),                      # megacore-shardable
            vmem_limit_bytes=_vmem_limit_bytes(tile_b, vmem_cap),
        ),
        cost_estimate=cost,
    )(x_fm, w1f, b1_col, w2f, b2_s)


# --------------------------------------------------------------------------- #
# Module-compatible wrapper: [B, 9] -> [B, 1]
# --------------------------------------------------------------------------- #
@functools.partial(jax.jit, static_argnames=("tile_b",))
def network_forward(x, w1, b1, w2, b2, *, tile_b=None):
    """Forward pass of the 9 -> 25 -> 1 sigmoid MLP (nn.Linear weight layout).

    Does a single relayout (transpose + lane pad) to feature-major before the
    kernel; call `mlp_forward_feature_major` directly with a [9, B] input to
    skip that pass entirely.
    """
    b = x.shape[0]
    b_lane = _round_up(max(b, 1), LANE)
    if tile_b is not None:
        b_lane = _round_up(b_lane, tile_b)

    x_fm = x.astype(jnp.float32).T                       # [9, B]   (layout plumbing)
    if b_lane != b:
        x_fm = jnp.pad(x_fm, ((0, 0), (0, b_lane - b)))  # [9, b_lane]

    out_fm = mlp_forward_feature_major(x_fm, w1, b1, w2, b2, tile_b=tile_b)
    return out_fm[0, :b].reshape(b, OUTPUT_DIM)          # [B, 1]


# --------------------------------------------------------------------------- #
# Params / reference
# --------------------------------------------------------------------------- #
def init_params(key):
    """Deterministic init mirroring nn.Linear's U(-1/sqrt(fan_in), 1/sqrt(fan_in))."""
    k1, k2, k3, k4 = jax.random.split(key, 4)
    bound1 = 1.0 / float(INPUT_DIM) ** 0.5
    bound2 = 1.0 / float(HIDDEN) ** 0.5
    w1 = jax.random.uniform(k1, (HIDDEN, INPUT_DIM), jnp.float32, -bound1, bound1)
    b1 = jax.random.uniform(k2, (HIDDEN,), jnp.float32, -bound1, bound1)
    w2 = jax.random.uniform(k3, (OUTPUT_DIM, HIDDEN), jnp.float32, -bound2, bound2)
    b2 = jax.random.uniform(k4, (OUTPUT_DIM,), jnp.float32, -bound2, bound2)
    return w1, b1, w2, b2


def _reference(x, w1, b1, w2, b2):
    return jax.nn.sigmoid(jax.nn.sigmoid(x @ w1.T + b1) @ w2.T + b2)


if __name__ == "__main__":
    key = jax.random.PRNGKey(0)
    kx, kp, kx2, kx3 = jax.random.split(key, 4)

    # Small shapes implied by the module: batch=8, features=9.
    B = 8
    x = jax.random.normal(kx, (B, INPUT_DIM), jnp.float32)
    w1, b1, w2, b2 = init_params(kp)

    out = jax.block_until_ready(network_forward(x, w1, b1, w2, b2))
    ref = _reference(x, w1, b1, w2, b2)
    assert out.shape == (B, OUTPUT_DIM)
    assert jnp.allclose(out, ref, atol=2e-5, rtol=2e-5)

    # Ragged batch (not a multiple of 128): tile picker chooses 128 -> 3 tiles,
    # exercising the multi-tile grid and the padding/tail slicing.
    B2 = 300
    x2 = jax.random.normal(kx2, (B2, INPUT_DIM), jnp.float32)
    out2 = jax.block_until_ready(network_forward(x2, w1, b1, w2, b2))
    ref2 = _reference(x2, w1, b1, w2, b2)
    assert out2.shape == (B2, OUTPUT_DIM)
    assert jnp.allclose(out2, ref2, atol=2e-5, rtol=2e-5)

    # Producer-side feature-major fast path (no wrapper relayout pass); the
    # >=2-tiles cap splits B3=512 into two 256-lane tiles (megacore-shardable).
    B3 = 512
    x3_fm = jax.random.normal(kx3, (INPUT_DIM, B3), jnp.float32)  # [9, B3]
    out3 = jax.block_until_ready(mlp_forward_feature_major(x3_fm, w1, b1, w2, b2))
    ref3 = _reference(x3_fm.T, w1, b1, w2, b2)
    assert out3.shape == (OUTPUT_DIM, B3)
    assert jnp.allclose(out3[0], ref3[:, 0], atol=2e-5, rtol=2e-5)

    print("KERNEL_OK")
</pallas_src>

<mosaic_0001>
module attributes {stable_mosaic.version = 11 : i64} {
  func.func @_mlp_kernel(%arg0: i32, %arg1: memref<9x128xf32, #tpu.memory_space<vmem>>, %arg2: memref<25x9xf32, #tpu.memory_space<vmem>>, %arg3: memref<25x1xf32, #tpu.memory_space<vmem>>, %arg4: memref<1x25xf32, #tpu.memory_space<vmem>>, %arg5: memref<1x1xf32, #tpu.memory_space<smem>>, %arg6: memref<1x128xf32, #tpu.memory_space<vmem>>) attributes {dimension_semantics = [#tpu.dimension_semantics<parallel>], iteration_bounds = array<i64: 1>, scalar_prefetch = 0 : i64, scratch_operands = 0 : i64, tpu.core_type = #tpu.core_type<tc>, window_params = [{transform_indices = @transform_0, window_bounds = array<i64: 9, 128>}, {pipeline_mode = #tpu.pipeline_mode<synchronous>, transform_indices = @transform_1, window_bounds = array<i64: 25, 9>}, {pipeline_mode = #tpu.pipeline_mode<synchronous>, transform_indices = @transform_2, window_bounds = array<i64: 25, 1>}, {pipeline_mode = #tpu.pipeline_mode<synchronous>, transform_indices = @transform_3, window_bounds = array<i64: 1, 25>}, {transform_indices = @transform_4, window_bounds = array<i64: 1, 1>}, {transform_indices = @transform_5, window_bounds = array<i64: 1, 128>}]} {
    %c0 = arith.constant 0 : index
    %c0_0 = arith.constant 0 : index
    %0 = vector.load %arg1[%c0, %c0_0] : memref<9x128xf32, #tpu.memory_space<vmem>>, vector<9x128xf32>
    %c0_1 = arith.constant 0 : index
    %c0_2 = arith.constant 0 : index
    %1 = vector.load %arg2[%c0_1, %c0_2] : memref<25x9xf32, #tpu.memory_space<vmem>>, vector<25x9xf32>
    %cst = arith.constant dense<0.000000e+00> : vector<25x128xf32>
    %2 = tpu.matmul %1, %0, %cst {dimension_numbers = #tpu.dot_dimension_numbers<[1], [0], [0], [1], [0, 0, 1, 1], [], []>} : vector<25x9xf32>, vector<9x128xf32>, vector<25x128xf32> -> vector<25x128xf32>
    %c0_3 = arith.constant 0 : index
    %c0_4 = arith.constant 0 : index
    %3 = vector.load %arg3[%c0_3, %c0_4] : memref<25x1xf32, #tpu.memory_space<vmem>>, vector<25x1xf32>
    %4 = vector.broadcast %3 : vector<25x1xf32> to vector<25x128xf32>
    %5 = arith.addf %2, %4 : vector<25x128xf32>
    %6 = arith.negf %5 : vector<25x128xf32>
    %7 = math.exp %6 : vector<25x128xf32>
    %cst_5 = arith.constant 1.000000e+00 : f32
    %8 = vector.broadcast %cst_5 : f32 to vector<25x128xf32>
    %9 = arith.addf %8, %7 : vector<25x128xf32>
    %10 = arith.divf %8, %9 : vector<25x128xf32>
    %c0_6 = arith.constant 0 : index
    %c0_7 = arith.constant 0 : index
    %11 = vector.load %arg4[%c0_6, %c0_7] : memref<1x25xf32, #tpu.memory_space<vmem>>, vector<1x25xf32>
    %cst_8 = arith.constant dense<0.000000e+00> : vector<1x128xf32>
    %12 = tpu.matmul %11, %10, %cst_8 {dimension_numbers = #tpu.dot_dimension_numbers<[1], [0], [0], [1], [0, 0, 1, 1], [], []>} : vector<1x25xf32>, vector<25x128xf32>, vector<1x128xf32> -> vector<1x128xf32>
    %c0_9 = arith.constant 0 : index
    %c0_10 = arith.constant 0 : index
    %13 = memref.load %arg5[%c0_9, %c0_10] : memref<1x1xf32, #tpu.memory_space<smem>>
    %14 = vector.broadcast %13 : f32 to vector<1x128xf32>
    %15 = arith.addf %12, %14 : vector<1x128xf32>
    %16 = arith.negf %15 : vector<1x128xf32>
    %17 = math.exp %16 : vector<1x128xf32>
    %cst_11 = arith.constant 1.000000e+00 : f32
    %18 = vector.broadcast %cst_11 : f32 to vector<1x128xf32>
    %19 = arith.addf %18, %17 : vector<1x128xf32>
    %20 = arith.divf %18, %19 : vector<1x128xf32>
    %c0_12 = arith.constant 0 : index
    %c0_13 = arith.constant 0 : index
    %21 = vector.load %arg6[%c0_12, %c0_13] : memref<1x128xf32, #tpu.memory_space<vmem>>, vector<1x128xf32>
    tpu.vector_store %arg6[%c0_12, %c0_13], %20 {strides = array<i32>} : memref<1x128xf32, #tpu.memory_space<vmem>>, vector<1x128xf32>,
    return
  }
  func.func @transform_0(%arg0: i32) -> (i32, i32) {
    %c0_i32 = arith.constant 0 : i32
    %c0_i32_0 = arith.constant 0 : i32
    return %c0_i32, %arg0 : i32, i32
  }
  func.func @transform_1(%arg0: i32) -> (i32, i32) {
    %c0_i32 = arith.constant 0 : i32
    %c0_i32_0 = arith.constant 0 : i32
    %c0_i32_1 = arith.constant 0 : i32
    return %c0_i32, %c0_i32_0 : i32, i32
  }
  func.func @transform_2(%arg0: i32) -> (i32, i32) {
    %c0_i32 = arith.constant 0 : i32
    %c0_i32_0 = arith.constant 0 : i32
    %c0_i32_1 = arith.constant 0 : i32
    return %c0_i32, %c0_i32_0 : i32, i32
  }
  func.func @transform_3(%arg0: i32) -> (i32, i32) {
    %c0_i32 = arith.constant 0 : i32
    %c0_i32_0 = arith.constant 0 : i32
    %c0_i32_1 = arith.constant 0 : i32
    return %c0_i32, %c0_i32_0 : i32, i32
  }
  func.func @transform_4(%arg0: i32) -> (i32, i32) {
    %c0_i32 = arith.constant 0 : i32
    %c0_i32_0 = arith.constant 0 : i32
    %c0_i32_1 = arith.constant 0 : i32
    return %c0_i32, %c0_i32_0 : i32, i32
  }
  func.func @transform_5(%arg0: i32) -> (i32, i32) {
    %c0_i32 = arith.constant 0 : i32
    %c0_i32_0 = arith.constant 0 : i32
    return %c0_i32, %arg0 : i32, i32
  }
}

</mosaic_0001>

<llo_original>
// kernel: network_forward.1
$region0: #{network_forward.1}
  #allocation0 [shape = 'u32[]', space=smem, size = 0x4, offset = 0x4, fixed_abs, tag = 'smem constant byte address 0x4 - core index']
  #allocation1 [shape = 'u32[72,128]{1,0:T(1,128)}', space=vmem, size = 0x9000, scoped, tag = 'internal scratch']
  #allocation2 [shape = 'f32[1,1]{1,0:T(1,128)S(6)}', space=smem, size = 0x200, scoped, tag = 'scoped memory for network_forward.1']
  %s0 = inlined_call_operand.vmem [shape: f32[9,128], index: 0, kind: input, shape index: {}]
  %s1 = inlined_call_operand.vmem [shape: f32[25,9], index: 1, kind: input, shape index: {}]
  %s2 = inlined_call_operand.vmem [shape: f32[25,1], index: 2, kind: input, shape index: {}]
  %s3 = inlined_call_operand.vmem [shape: f32[1,25], index: 3, kind: input, shape index: {}]
  %s4 = inlined_call_operand.<no memory space> [shape: f32[1,1], index: 4, kind: input, shape index: {}]
  %s5 = inlined_call_operand.vmem [shape: f32[1,128], index: 5, kind: output, shape index: {}]
  %s6 = sld [smem:[#allocation0]]
  $region30: #{network_forward.1} parent=0
    _
  %s8 = ssub.s32 1, %s6
  %s9 = scalar_select 0, %s8, %s6
  %10 = sst [smem:[#allocation2]] %s4
  // Predicated region
  $region2: #{network_forward.1} parent=0 // pred_check
    _
  $region3: #{network_forward.1} parent=0 // pred_check_branch
    %12 = sbr.rel (0) target = $region5
  $region4: #{network_forward.1} parent=0 // pred_region
    _
  $region5: #{network_forward.1} parent=0 // pred_fallthru
    _
  // Predicated region
  $region6: #{network_forward.1} parent=0 // pred_check
    _
  $region7: #{network_forward.1} parent=0 // pred_check_branch
    %14 = sbr.rel (0) target = $region9
  $region8: #{network_forward.1} parent=0 // pred_region
    _
  $region9: #{network_forward.1} parent=0 // pred_fallthru
    _
  // Predicated region
  $region10: #{network_forward.1} parent=0 // pred_check
    _
  $region11: #{network_forward.1} parent=0 // pred_check_branch
    %16 = sbr.rel (0) target = $region13
  $region12: #{network_forward.1} parent=0 // pred_region
    _
  $region13: #{network_forward.1} parent=0 // pred_fallthru
    _
  // Predicated region
  $region14: #{network_forward.1} parent=0 // pred_check
    _
  $region15: #{network_forward.1} parent=0 // pred_check_branch
    %18 = sbr.rel (0) target = $region17
  $region16: #{network_forward.1} parent=0 // pred_region
    _
  $region17: #{network_forward.1} parent=0 // pred_fallthru
    _
  // Predicated region
  $region18: #{network_forward.1} parent=0 // pred_check
    _
  $region19: #{network_forward.1} parent=0 // pred_check_branch
    %20 = sbr.rel (0) target = $region21
  $region20: #{network_forward.1} parent=0 // pred_region
    _
  $region21: #{network_forward.1} parent=0 // pred_fallthru
    _
  %v21 = vld [vmem:[%s0] sm:$0xff]
  %v22 = vld [vmem:[%s0 + $0x8] sm:$0x1]
  %v23 = vld [vmem:[%s1] sm:$0xff]
  %v24 = vld [vmem:[%s1 + $0x8] sm:$0xff]
  %v25 = vld [vmem:[%s1 + $0x10] sm:$0xff]
  %v26 = vld [vmem:[%s1 + $0x18] sm:$0x1]
  %v27 = vld [vmem:[%s2] sm:$0xff]
  %v28 = vld [vmem:[%s2 + $0x8] sm:$0xff]
  %v29 = vld [vmem:[%s2 + $0x10] sm:$0xff]
  %v30 = vld [vmem:[%s2 + $0x18] sm:$0x1]
  %32 = vset.pattern.permute.xlu0 0
  %33 = vperm.xlu0 %32, %v27
  %v34 = vpop.permute.xlu0 %33
  %37 = vset.pattern.permute.xlu0 0
  %38 = vperm.xlu0 %37, %v28
  %v39 = vpop.permute.xlu0 %38
  %42 = vset.pattern.permute.xlu0 0
  %43 = vperm.xlu0 %42, %v29
  %v44 = vpop.permute.xlu0 %43
  %47 = vset.pattern.permute.xlu0 0
  %48 = vperm.xlu0 %47, %v30
  %v49 = vpop.permute.xlu0 %48
  %vm51 = vcmask 72704
  %v53 = vsel %vm51, %v23, 0
  %v56 = vsel %vm51, %v24, 0
  %v59 = vsel %vm51, %v25, 0
  %v62 = vsel %vm51, %v26, 0
  %vm64 = vcmask 1040384
  %v66 = vsel %vm64, %v22, 0
  %68 = vmatpush.msra.mxu0 0.0
  %69 = vmatpush.msra.mxu0 0.0
  %70 = vmatpush.msra.mxu0 0.0
  %71 = vmatpush.msra.mxu0 0.0
  %72 = vmatpush.msra.mxu0 0.0
  %73 = vmatpush.msra.mxu0 0.0
  %74 = vmatpush.msra.mxu0 0.0
  %75 = vmatpush.msra.mxu0 0.0
  %76 = vmatpush.msra.mxu0 0.0
  %77 = vmatpush.msra.mxu0 0.0
  %78 = vmatpush.msra.mxu0 0.0
  %79 = vmatpush.msra.mxu0 0.0
  %80 = vmatpush.msra.mxu0 0.0
  %81 = vmatpush.msra.mxu0 0.0
  %82 = vmatpush.msra.mxu0 %v66
  %83 = vmatpush.msra.mxu0 %v21
  %84 = vmatmul.f32.gmra.mxu0 %v53
  %v85 = vpop.f32.mrf.mxu0
  %v86 = vadd.f32 %v34, %v85
  %87 = vmatmul.f32.gmra.mxu0 %v56
  %v88 = vpop.f32.mrf.mxu0
  %v89 = vadd.f32 %v39, %v88
  %90 = vmatmul.f32.gmra.mxu0 %v59
  %v91 = vpop.f32.mrf.mxu0
  %v92 = vadd.f32 %v44, %v91
  %93 = vmatmul.f32.gmra.mxu0 %v62
  %v94 = vpop.f32.mrf.mxu0
  %v95 = vadd.f32 %v49, %v94
  %96 = vdwg.mxu0
  %v97 = vxor.u32 %v86, 2147483648
  %v98 = vxor.u32 %v89, 2147483648
  %v99 = vxor.u32 %v92, 2147483648
  %v100 = vxor.u32 %v95, 2147483648
  %v101 = vmul.f32 %v97, 1.442695
  %v102 = vpow.pop %v101
  %v103 = vmul.f32 %v98, 1.442695
  %v104 = vpow.pop %v103
  %v105 = vmul.f32 %v99, 1.442695
  %v106 = vpow.pop %v105
  %v107 = vmul.f32 %v100, 1.442695
  %v108 = vpow.pop %v107
  %v109 = vadd.f32 %v102, 1.0
  %v110 = vadd.f32 %v104, 1.0
  %v111 = vadd.f32 %v106, 1.0
  %v112 = vadd.f32 %v108, 1.0
  %v113 = vrcp.pop %v109
  %v114 = vmul.f32 %v109, %v113
  %v115 = vsub.f32 1.0, %v114
  %v116 = vmul.f32 %v113, %v115
  %v117 = vadd.f32 %v113, %v116
  %vm118 = vweird.f32 %v109
  %vm119 = vweird.f32 %v113
  %vm120 = vmor %vm118, %vm119
  %v121 = vsel %vm120, %v113, %v117
  %v122 = vand.u32 2147483647, %v109
  %vm123 = vcmp.eq.f32.partialorder %v122, 8.507059e+37
  %v124 = vand.u32 %v109, 2147483648
  %v125 = vor.u32 1.1754944e-38, %v124
  %v126 = vsel %vm123, %v125, %v121
  %v127 = vmul.f32 1.0, %v126
  %v128 = vrcp.pop %v110
  %v129 = vmul.f32 %v110, %v128
  %v130 = vsub.f32 1.0, %v129
  %v131 = vmul.f32 %v128, %v130
  %v132 = vadd.f32 %v128, %v131
  %vm133 = vweird.f32 %v110
  %vm134 = vweird.f32 %v128
  %vm135 = vmor %vm133, %vm134
  %v136 = vsel %vm135, %v128, %v132
  %v137 = vand.u32 2147483647, %v110
  %vm138 = vcmp.eq.f32.partialorder %v137, 8.507059e+37
  %v139 = vand.u32 %v110, 2147483648
  %v140 = vor.u32 1.1754944e-38, %v139
  %v141 = vsel %vm138, %v140, %v136
  %v142 = vmul.f32 1.0, %v141
  %v143 = vrcp.pop %v111
  %v144 = vmul.f32 %v111, %v143
  %v145 = vsub.f32 1.0, %v144
  %v146 = vmul.f32 %v143, %v145
  %v147 = vadd.f32 %v143, %v146
  %vm148 = vweird.f32 %v111
  %vm149 = vweird.f32 %v143
  %vm150 = vmor %vm148, %vm149
  %v151 = vsel %vm150, %v143, %v147
  %v152 = vand.u32 2147483647, %v111
  %vm153 = vcmp.eq.f32.partialorder %v152, 8.507059e+37
  %v154 = vand.u32 %v111, 2147483648
  %v155 = vor.u32 1.1754944e-38, %v154
  %v156 = vsel %vm153, %v155, %v151
  %v157 = vmul.f32 1.0, %v156
  %v158 = vrcp.pop %v112
  %v159 = vmul.f32 %v112, %v158
  %v160 = vsub.f32 1.0, %v159
  %v161 = vmul.f32 %v158, %v160
  %v162 = vadd.f32 %v158, %v161
  %vm163 = vweird.f32 %v112
  %vm164 = vweird.f32 %v158
  %vm165 = vmor %vm163, %vm164
  %v166 = vsel %vm165, %v158, %v162
  %v167 = vand.u32 2147483647, %v112
  %vm168 = vcmp.eq.f32.partialorder %v167, 8.507059e+37
  %v169 = vand.u32 %v112, 2147483648
  %v170 = vor.u32 1.1754944e-38, %v169
  %v171 = vsel %vm168, %v170, %v166
  %v172 = vmul.f32 1.0, %v171
  %v173 = vld [vmem:[%s3] sm:$0x1]
  %s174 = sld [smem:[#allocation2]]
  %v175 = vstv %s174
  %vm176 = vcmask 203776
  %v178 = vsel %vm176, %v173, 0
  %v181 = vsel %vm64, %v172, 0
  %183 = vmatpush.msra.mxu0 0.0
  %184 = vmatpush.msra.mxu0 0.0
  %185 = vmatpush.msra.mxu0 0.0
  %186 = vmatpush.msra.mxu0 0.0
  %187 = vmatpush.msra.mxu0 0.0
  %188 = vmatpush.msra.mxu0 0.0
  %189 = vmatpush.msra.mxu0 0.0
  %190 = vmatpush.msra.mxu0 0.0
  %191 = vmatpush.msra.mxu0 0.0
  %192 = vmatpush.msra.mxu0 0.0
  %193 = vmatpush.msra.mxu0 0.0
  %194 = vmatpush.msra.mxu0 0.0
  %195 = vmatpush.msra.mxu0 %v181
  %196 = vmatpush.msra.mxu0 %v157
  %197 = vmatpush.msra.mxu0 %v142
  %198 = vmatpush.msra.mxu0 %v127
  %199 = vmatmul.f32.gmra.mxu0 %v178
  %v200 = vpop.f32.mrf.mxu0
  %v201 = vadd.f32 %v175, %v200
  %202 = vdwg.mxu0
  %v203 = vxor.u32 %v201, 2147483648
  %v204 = vmul.f32 %v203, 1.442695
  %v205 = vpow.pop %v204
  %v206 = vadd.f32 %v205, 1.0
  %v207 = vrcp.pop %v206
  %v208 = vmul.f32 %v206, %v207
  %v209 = vsub.f32 1.0, %v208
  %v210 = vmul.f32 %v207, %v209
  %v211 = vadd.f32 %v207, %v210
  %vm212 = vweird.f32 %v206
  %vm213 = vweird.f32 %v207
  %vm214 = vmor %vm212, %vm213
  %v215 = vsel %vm214, %v207, %v211
  %v216 = vand.u32 2147483647, %v206
  %vm217 = vcmp.eq.f32.partialorder %v216, 8.507059e+37
  %v218 = vand.u32 %v206, 2147483648
  %v219 = vor.u32 1.1754944e-38, %v218
  %v220 = vsel %vm217, %v219, %v215
  %v221 = vmul.f32 1.0, %v220
  %222 = vst [vmem:[%s5] sm:$0x1] %v221
  // Predicated region
  $region22: #{network_forward.1} parent=0 // pred_check
    _
  $region23: #{network_forward.1} parent=0 // pred_check_branch
    %224 = sbr.rel (0) target = $region25
  $region24: #{network_forward.1} parent=0 // pred_region
    _
  $region25: #{network_forward.1} parent=0 // pred_fallthru
    _
  // Predicated region
  $region26: #{network_forward.1} parent=0 // pred_check
    _
  $region27: #{network_forward.1} parent=0 // pred_check_branch
    %226 = sbr.rel (0) target = $region29
  $region28: #{network_forward.1} parent=0 // pred_region
    _
  $region29: #{network_forward.1} parent=0 // pred_fallthru
    _

</llo_original>
